<compile_context>
chip_gen: v7x
topology: tpu7x:2x2x1
jax: 0.10.0
libtpu: 0.0.40
codegen_flags: <defaults>
</compile_context>

<pallas_src>
import functools
import math

import numpy as np
import jax
import jax.numpy as jnp
from jax.experimental import pallas as pl
from jax.experimental.pallas import tpu as pltpu


# ----------------------------------------------------------------------------
# Fused kernel: one Res2Net bottleneck block for `batch` images, channel-major.
#   x_ref  : (B, Cin, HW)               lane-dense per-image input tiles
#   w1_ref : (C1, Cin)                  conv1 weight^T, BN1 scale folded in
#   b1_ref : (C1, 1)                    folded BN1 bias
#   w2_ref : ((scale-1)*width, 9*width) 3x3 weights, BN folded, cols=(tap,cin)
#   b2_ref : ((scale-1)*width, 1)       folded BN bias per branch channel
#   w3_ref : (Cout, C1)                 conv3 weight^T, BN3 scale folded in
#   b3_ref : (Cout, 1)                  folded BN3 bias
#   o_ref  : (B, Cout, HW)              lane-dense per-image output tiles
# ----------------------------------------------------------------------------
def _bottle2neck_kernel(x_ref, w1_ref, b1_ref, w2_ref, b2_ref, w3_ref, b3_ref,
                        o_ref, *, H, W, width, scale, batch, roll_np):
    HW = H * W

    # -- geometry constants, built ONCE per grid step (hoisted out of the
    #    image / branch / tap loops) ------------------------------------------
    lane = jax.lax.broadcasted_iota(jnp.int32, (width, HW), 1)
    row = lane // W
    col = lane % W
    shifts = []
    mask_chunks = []
    for dh in range(3):
        for dw in range(3):
            off = (dh - 1) * W + (dw - 1)          # src = dst + off (flattened)
            shifts.append(((-off) if roll_np else off) % HW)
            rr = row + (dh - 1)
            cc = col + (dw - 1)
            valid = (rr >= 0) & (rr < H) & (cc >= 0) & (cc < W)
            mask_chunks.append(valid.astype(jnp.float32))
    tap_mask = jnp.concatenate(mask_chunks, axis=0)        # (9*width, HW)

    # -- weights / biases loaded once; per-branch views are free sublane slices
    w1t = w1_ref[...]                                      # (C1, Cin)
    b1 = b1_ref[...]                                       # (C1, 1)
    w3t = w3_ref[...]                                      # (Cout, C1)
    b3 = b3_ref[...]                                       # (Cout, 1)
    w2 = w2_ref[...]                                       # ((s-1)*w, 9*w)
    b2 = b2_ref[...]                                       # ((s-1)*w, 1)
    w2_b = [w2[i * width:(i + 1) * width, :] for i in range(scale - 1)]
    b2_b = [b2[i * width:(i + 1) * width, :] for i in range(scale - 1)]

    for b in range(batch):
        x = x_ref[b]                                       # (Cin, HW)

        # conv1 (1x1) + bn1 + relu  (BN scale folded into w1t)
        out1 = jnp.dot(w1t, x, preferred_element_type=jnp.float32)
        out1 = jnp.maximum(out1 + b1, 0.0)                 # (C1, HW)

        sp = None
        branch_outs = []
        for i in range(scale - 1):
            sp_in = out1[i * width:(i + 1) * width, :]     # free sublane slice
            if i > 0:
                sp_in = sp_in + sp                         # Res2Net pre-add
            # 3x3 / stride-1 / pad-1 conv: 9 lane-rolled taps stacked along
            # the sublane axis -> one K=9*width MXU matmul.
            taps = [sp_in if s == 0 else pltpu.roll(sp_in, s, axis=1)
                    for s in shifts]
            taps = jnp.concatenate(taps, axis=0) * tap_mask      # (9*w, HW)
            sp = jnp.dot(w2_b[i], taps, preferred_element_type=jnp.float32)
            sp = jnp.maximum(sp + b2_b[i], 0.0)            # bn + relu
            branch_outs.append(sp)
        branch_outs.append(out1[(scale - 1) * width:scale * width, :])

        # concat (free, sublane axis) -> conv3 (1x1) + bn3 + residual + relu
        cat = jnp.concatenate(branch_outs, axis=0)         # (C1, HW)
        y = jnp.dot(w3t, cat, preferred_element_type=jnp.float32) + b3 + x
        o_ref[b] = jnp.maximum(y, 0.0).astype(o_ref.dtype)


# ----------------------------------------------------------------------------
# Wrapper helpers
# ----------------------------------------------------------------------------
def _pick_batch(n):
    # Amortize per-grid-step overhead, but keep >= 2 grid steps when possible
    # (v7x has 2 TensorCores sharded over "parallel" grid axes).
    for b in (8, 4, 2):
        if n % b == 0 and n // b >= 2:
            return b
    return 1


@functools.lru_cache(maxsize=None)
def _roll_matches_numpy():
    """One-time device probe for pltpu.roll's rotation direction."""
    def probe(x_r, o_r):
        o_r[...] = pltpu.roll(x_r[...], 1, axis=1)
    x = jnp.broadcast_to(jnp.arange(128, dtype=jnp.float32)[None, :], (8, 128))
    out = pl.pallas_call(
        probe, out_shape=jax.ShapeDtypeStruct((8, 128), jnp.float32))(x)
    # numpy convention: rolling by +1 moves the last element to the front.
    return bool(jax.device_get(out)[0, 0] == 127.0)


def bottle2neck_w_forward(x_nchw, params):
    scale_ = params['scale']
    width = params['width']
    assert scale_ >= 2, "only scale >= 2 supported"
    N, Cin, H, W = x_nchw.shape
    HW = H * W
    C1 = width * scale_
    Cout = params['w3'].shape[1]
    assert Cout == Cin, "identity residual requires downsample=None / Cout==Cin"

    # NCHW -> (N, Cin, H*W): free reshape; the per-image HBM tile stays
    # channel-major and lane-dense (HW on lanes) for both the load and store.
    x = x_nchw.reshape(N, Cin, HW).astype(jnp.float32)

    # Fold BN scale into the conv weights (inference-mode BN) and pre-transpose
    # the 1x1 weights so the kernel never transposes activations.
    w1t = (params['w1'] * params['s1'][None, :]).T.astype(jnp.float32)   # (C1,Cin)
    b1f = params['b1'].reshape(C1, 1).astype(jnp.float32)
    w2f = []
    for i in range(scale_ - 1):
        w = params['w2'][i] * params['s2'][i][None, None, None, :]       # (3,3,I,O)
        w2f.append(jnp.transpose(w, (3, 0, 1, 2)).reshape(width, 9 * width))
    w2f = jnp.concatenate(w2f, axis=0).astype(jnp.float32)   # ((s-1)*w, 9*w)
    b2f = jnp.stack(params['b2']).reshape((scale_ - 1) * width, 1).astype(jnp.float32)
    w3t = (params['w3'] * params['s3'][None, :]).T.astype(jnp.float32)   # (Cout,C1)
    b3f = params['b3'].reshape(Cout, 1).astype(jnp.float32)

    B = _pick_batch(N)
    kernel = functools.partial(_bottle2neck_kernel, H=H, W=W, width=width,
                               scale=scale_, batch=B,
                               roll_np=_roll_matches_numpy())

    out = pl.pallas_call(
        kernel,
        out_shape=jax.ShapeDtypeStruct((N, Cout, HW), jnp.float32),
        grid_spec=pltpu.PrefetchScalarGridSpec(
            num_scalar_prefetch=0,
            grid=(N // B,),
            in_specs=[
                pl.BlockSpec((B, Cin, HW), lambda n: (n, 0, 0)),
                pl.BlockSpec((C1, Cin), lambda n: (0, 0)),
                pl.BlockSpec((C1, 1), lambda n: (0, 0)),
                pl.BlockSpec(((scale_ - 1) * width, 9 * width), lambda n: (0, 0)),
                pl.BlockSpec(((scale_ - 1) * width, 1), lambda n: (0, 0)),
                pl.BlockSpec((Cout, C1), lambda n: (0, 0)),
                pl.BlockSpec((Cout, 1), lambda n: (0, 0)),
            ],
            out_specs=pl.BlockSpec((B, Cout, HW), lambda n: (n, 0, 0)),
        ),
        compiler_params=pltpu.CompilerParams(
            dimension_semantics=("parallel",)),
    )(x, w1t, b1f, w2f, b2f, w3t, b3f)

    return out.reshape(N, Cout, H, W)            # already NCHW


# ----------------------------------------------------------------------------
# Pure-JAX reference (for correctness checking)
# ----------------------------------------------------------------------------
def reference_forward(x_nchw, params):
    x = jnp.transpose(x_nchw, (0, 2, 3, 1)).astype(jnp.float32)   # NHWC
    scale_, width = params['scale'], params['width']
    bn = lambda y, s, b: y * s + b
    out = jnp.maximum(bn(jnp.einsum('nhwc,cd->nhwd', x, params['w1']),
                         params['s1'], params['b1']), 0.0)
    spx = [out[..., i * width:(i + 1) * width] for i in range(scale_)]
    sp = None
    outs = []
    for i in range(scale_ - 1):
        s_in = spx[i] if i == 0 else sp + spx[i]
        y = jax.lax.conv_general_dilated(
            s_in, params['w2'][i], (1, 1), 'SAME',
            dimension_numbers=('NHWC', 'HWIO', 'NHWC'))
        sp = jnp.maximum(bn(y, params['s2'][i], params['b2'][i]), 0.0)
        outs.append(sp)
    outs.append(spx[scale_ - 1])
    cat = jnp.concatenate(outs, axis=-1)
    y = bn(jnp.einsum('nhwc,cd->nhwd', cat, params['w3']),
           params['s3'], params['b3'])
    y = jnp.maximum(y + x, 0.0)
    return jnp.transpose(y, (0, 3, 1, 2))


if __name__ == "__main__":
    # Module config: inplanes=32, planes=8, base_width=64, scale=4
    #   width = floor(planes * base_width / 64) = 8,  width*scale = 32
    #   conv3 output = planes * expansion = 32 == inplanes -> identity residual
    inplanes, planes, base_width, scale_, expansion = 32, 8, 64, 4, 4
    width = int(math.floor(planes * base_width / 64))
    assert inplanes == planes * expansion
    N, H, W = 4, 16, 16

    key = jax.random.PRNGKey(0)
    keys = iter(jax.random.split(key, 32))
    nxt = lambda: next(keys)

    def bn_params(k, c):
        k1, k2, k3, k4 = jax.random.split(k, 4)
        gamma = jax.random.uniform(k1, (c,), jnp.float32, 0.5, 1.5)
        beta = 0.1 * jax.random.normal(k2, (c,), jnp.float32)
        mean = 0.1 * jax.random.normal(k3, (c,), jnp.float32)
        var = jax.random.uniform(k4, (c,), jnp.float32, 0.5, 1.5)
        s = gamma / jnp.sqrt(var + 1e-5)
        b = beta - mean * s
        return s, b

    # Conv weights are stored in matmul layout: 1x1 as (Cin, Cout), 3x3 as HWIO
    # (equivalent to the transposed/rearranged PyTorch OIHW tensors).
    w1 = 0.1 * jax.random.normal(nxt(), (inplanes, width * scale_), jnp.float32)
    s1, b1 = bn_params(nxt(), width * scale_)
    w2 = [0.1 * jax.random.normal(nxt(), (3, 3, width, width), jnp.float32)
          for _ in range(scale_ - 1)]
    sb2 = [bn_params(nxt(), width) for _ in range(scale_ - 1)]
    w3 = 0.1 * jax.random.normal(nxt(), (width * scale_, planes * expansion),
                                 jnp.float32)
    s3, b3 = bn_params(nxt(), planes * expansion)

    params = dict(scale=scale_, width=width,
                  w1=w1, s1=s1, b1=b1,
                  w2=w2, s2=[s for s, _ in sb2], b2=[b for _, b in sb2],
                  w3=w3, s3=s3, b3=b3)

    x = jax.random.normal(nxt(), (N, inplanes, H, W), jnp.float32)   # NCHW

    out = jax.block_until_ready(bottle2neck_w_forward(x, params))
    ref = jax.block_until_ready(reference_forward(x, params))
    np.testing.assert_allclose(np.asarray(out), np.asarray(ref),
                               rtol=2e-2, atol=2e-2)
    print("KERNEL_OK")
</pallas_src>

<mosaic_0001>
module attributes {stable_mosaic.version = 11 : i64} {
  func.func @probe(%arg0: memref<8x128xf32, #tpu.memory_space<vmem>>, %arg1: memref<8x128xf32, #tpu.memory_space<vmem>>) attributes {dimension_semantics = [], scalar_prefetch = 0 : i64, scratch_operands = 0 : i64, tpu.core_type = #tpu.core_type<tc>} {
    %c0 = arith.constant 0 : index
    %c0_0 = arith.constant 0 : index
    %0 = vector.load %arg0[%c0, %c0_0] : memref<8x128xf32, #tpu.memory_space<vmem>>, vector<8x128xf32>
    %c1_i32 = arith.constant 1 : i32
    %1 = tpu.dynamic_rotate %0 by %c1_i32 dim 1 : vector<8x128xf32>, i32 -> vector<8x128xf32>
    %c0_1 = arith.constant 0 : index
    %c0_2 = arith.constant 0 : index
    %2 = vector.load %arg1[%c0_1, %c0_2] : memref<8x128xf32, #tpu.memory_space<vmem>>, vector<8x128xf32>
    tpu.vector_store %arg1[%c0_1, %c0_2], %1 {strides = array<i32>} : memref<8x128xf32, #tpu.memory_space<vmem>>, vector<8x128xf32>,
    return
  }
}

</mosaic_0001>

<llo_original>
// kernel: tpu_custom_call.1
$region0: #{tpu_custom_call.1}
  #allocation0 [shape = 'u32[]', space=smem, size = 0x4, offset = 0x4, fixed_abs, tag = 'smem constant byte address 0x4 - core index']
  #allocation1 [shape = 'u32[144,128]{1,0:T(1,128)}', space=vmem, size = 0x12000, scoped, tag = 'internal scratch']
  %s0 = inlined_call_operand.hbm [shape: f32[8,128], index: 0, kind: input, shape index: {}]
  %s1 = inlined_call_operand.hbm [shape: f32[8,128], index: 1, kind: output, shape index: {}]
  %s2 = sld [smem:[#allocation0]]
  $region18: #{tpu_custom_call.1} parent=0
    _
  %s4 = ssub.s32 1, %s2
  %s5 = scalar_select 0, %s4, %s2
  $region1: #{tpu_custom_call.1} parent=0
    #allocation2 [shape = 'u8[4096]{0}', space=vmem, size = 0x1000, scoped, tag = 'input window, operand 0, single buffered']
    #allocation3 [shape = 's32[1]{0}', space=sflag, size = 0x4, scoped, tag = 'scoped memory for tpu_custom_call.1']
    #allocation4 [shape = 's32[1]{0}', space=sflag, size = 0x4, scoped, tag = 'scoped memory for tpu_custom_call.1']
    #allocation5 [shape = 'u8[4096]{0}', space=vmem, size = 0x1000, scoped, tag = 'output window, operand 0, single buffered']
    %6 = vsyncpa [#allocation3], 0
    %7 = vsyncpa [#allocation4], 0
    // Predicated region
    $region2: #{tpu_custom_call.1} parent=1 // pred_check
      _
    $region3: #{tpu_custom_call.1} parent=1 // pred_check_branch
      %9 = sbr.rel (0) target = $region5
    $region4: #{tpu_custom_call.1} parent=1 // pred_region
      %s11 = ssub.s32 128, 128
      %12 = vsyncadd [#allocation3], %s11
      %s14 = sshll.u32 [#allocation2], 4
      %s15 = int_to_ptr.vmem [resolvable:$true] %s14
      %17 = dma.hbm_to_vmem [thread:$0]  %s0, 128, %s15, [#allocation3]
    $region5: #{tpu_custom_call.1} parent=1 // pred_fallthru
      _
    // Predicated region
    $region6: #{tpu_custom_call.1} parent=1 // pred_check
      _
    $region7: #{tpu_custom_call.1} parent=1 // pred_check_branch
      %19 = sbr.rel (0) target = $region9
    $region8: #{tpu_custom_call.1} parent=1 // pred_region
      %20 = dma.done [#allocation3], 128
    $region9: #{tpu_custom_call.1} parent=1 // pred_fallthru
      _
    %v21 = vld [vmem:[#allocation2] sm:$0xff]
    %22 = vrot.lane.b32.xlu0 %v21, 1
    %v23 = vpop.permute.xlu0 %22
    %24 = vst [vmem:[#allocation5] sm:$0xff] %v23
    // Predicated region
    $region10: #{tpu_custom_call.1} parent=1 // pred_check
      _
    $region11: #{tpu_custom_call.1} parent=1 // pred_check_branch
      %26 = sbr.rel (0) target = $region13
    $region12: #{tpu_custom_call.1} parent=1 // pred_region
      %s28 = ssub.s32 128, 128
      %29 = vsyncadd [#allocation4], %s28
      %s31 = sshll.u32 [#allocation5], 4
      %s32 = int_to_ptr.vmem [resolvable:$true] %s31
      %34 = dma.vmem_to_hbm [thread:$0]  %s32, 128, %s1, [#allocation4]
    $region13: #{tpu_custom_call.1} parent=1 // pred_fallthru
      _
    // Predicated region
    $region14: #{tpu_custom_call.1} parent=1 // pred_check
      _
    $region15: #{tpu_custom_call.1} parent=1 // pred_check_branch
      %36 = sbr.rel (0) target = $region17
    $region16: #{tpu_custom_call.1} parent=1 // pred_region
      %37 = dma.done [#allocation4], 128
    $region17: #{tpu_custom_call.1} parent=1 // pred_fallthru
      _
    %38 = vsyncpa [#allocation3], 1
    %39 = vsyncpa [#allocation4], 1

</llo_original>
